<compile_context>
chip_gen: v7x
topology: tpu7x:2x2x1
jax: 0.10.0
libtpu: 0.0.40
codegen_flags: <defaults>
</compile_context>

<pallas_src>
import jax
import jax.numpy as jnp
from jax.experimental import pallas as pl
from jax.experimental.pallas import tpu as pltpu


def _round_up(v, m):
    return ((v + m - 1) // m) * m


def _qlinear_kernel(x_ref, wt_ref, os_ref, b_ref, o_ref, acc_ref):
    """One (TM, TN) output tile, accumulated over the K grid axis.

    x_ref  : (TM, TK) bf16   pre-quantized integer-valued activation tile
    wt_ref : (TK, TN) bf16   pre-quantized, pre-transposed integer-valued weight
    os_ref : (TM, 1)  f32    per-row output de-scale  max|x_row| * max|w| / L^2
    b_ref  : (1, TN)  f32    bias tile
    o_ref  : (TM, TN) f32    output tile
    acc_ref: (TM, TN) f32    VMEM accumulator (resident across the K axis)
    """
    k = pl.program_id(2)

    @pl.when(k == 0)
    def _init():
        acc_ref[...] = jnp.zeros_like(acc_ref)

    acc_ref[...] += jnp.dot(
        x_ref[...], wt_ref[...], preferred_element_type=jnp.float32
    )

    @pl.when(k == pl.num_programs(2) - 1)
    def _finalize():
        o_ref[...] = (acc_ref[...] * os_ref[...] + b_ref[...]).astype(o_ref.dtype)


def quantized_linear(x, weight, bias, *, bit_data=2, tm=256, tn=512, tk=512):
    """x: (B, In) f32; weight: (Out, In) f32; bias: (Out,) f32 -> (B, Out) f32."""
    B, In = x.shape
    Out, In_w = weight.shape
    assert In == In_w
    L = float(2 ** (bit_data - 1) - 1)

    # bf16 holds the integer grid [-L, L] exactly for bit_data <= 8; fall back
    # to f32 for wider quantizers.
    mxu_dtype = jnp.bfloat16 if bit_data <= 8 else jnp.float32

    # ---- hoisted (global-reduction) quantization prep ----------------------
    # Per-tensor weight scale: quantize + transpose the weight ONCE.
    sw = jnp.max(jnp.abs(weight))
    sw_safe = jnp.where(sw == 0.0, 1.0, sw)
    w_int_t = jnp.round(weight / sw_safe * L).astype(mxu_dtype).T        # (In, Out)

    # Per-row activation scale over the FULL In dimension; quantize ONCE.
    sx = jnp.max(jnp.abs(x), axis=-1, keepdims=True)                     # (B, 1)
    sx_safe = jnp.where(sx == 0.0, 1.0, sx)
    x_int = jnp.round(x / sx_safe * L).astype(mxu_dtype)                 # (B, In)
    o_scale = (sx * sw / (L * L)).astype(jnp.float32)                    # (B, 1)

    # ---- lane-dense tiling + zero padding ----------------------------------
    TM = min(tm, _round_up(B, 8))
    TN = min(tn, _round_up(Out, 128))
    TK = min(tk, _round_up(In, 128))
    Mp, Np, Kp = _round_up(B, TM), _round_up(Out, TN), _round_up(In, TK)

    x_p = jnp.zeros((Mp, Kp), mxu_dtype).at[:B, :In].set(x_int)
    w_p = jnp.zeros((Kp, Np), mxu_dtype).at[:In, :Out].set(w_int_t)
    os_p = jnp.zeros((Mp, 1), jnp.float32).at[:B, :].set(o_scale)
    b_p = jnp.zeros((1, Np), jnp.float32).at[0, :Out].set(bias)

    grid = (Mp // TM, Np // TN, Kp // TK)

    # Rough double-buffered VMEM footprint (bytes) for the scoped-VMEM hint.
    item = jnp.dtype(mxu_dtype).itemsize
    vmem_bytes = (
        2 * (TM * TK * item + TK * TN * item + TM * 4 + TN * 4 + TM * TN * 4)
        + TM * TN * 4
    )

    out_p = pl.pallas_call(
        _qlinear_kernel,
        out_shape=jax.ShapeDtypeStruct((Mp, Np), jnp.float32),
        grid_spec=pltpu.PrefetchScalarGridSpec(
            num_scalar_prefetch=0,
            grid=grid,
            in_specs=[
                pl.BlockSpec((TM, TK), lambda i, j, k: (i, k)),   # x_int
                pl.BlockSpec((TK, TN), lambda i, j, k: (k, j)),   # w_int^T (K, N)
                pl.BlockSpec((TM, 1), lambda i, j, k: (i, 0)),    # sx*sw/L^2
                pl.BlockSpec((1, TN), lambda i, j, k: (0, j)),    # bias
            ],
            out_specs=pl.BlockSpec((TM, TN), lambda i, j, k: (i, j)),
            scratch_shapes=[pltpu.VMEM((TM, TN), jnp.float32)],
        ),
        compiler_params=pltpu.CompilerParams(
            dimension_semantics=("parallel", "parallel", "arbitrary"),
            vmem_limit_bytes=max(2 * vmem_bytes, 32 * 1024 * 1024),
        ),
    )(x_p, w_p, os_p, b_p)

    return out_p[:B, :Out]


def _reference(x, weight, bias, bit_data=2):
    L = float(2 ** (bit_data - 1) - 1)
    sx = jnp.max(jnp.abs(x), axis=-1, keepdims=True)
    x_q = jnp.round(x / jnp.where(sx == 0, 1.0, sx) * L) / L * sx
    sw = jnp.max(jnp.abs(weight))
    w_q = jnp.round(weight / jnp.where(sw == 0, 1.0, sw) * L) / L * sw
    return x_q @ w_q.T + bias


if __name__ == "__main__":
    # Small shapes consistent with nn.Linear(input_feature, output_feature).
    batch, in_features, out_features = 8, 32, 16
    bit_data = 2

    key = jax.random.PRNGKey(0)
    kx, kw, kb = jax.random.split(key, 3)

    x = jax.random.normal(kx, (batch, in_features), dtype=jnp.float32)
    # Deterministic init mimicking nn.Linear's uniform(-1/sqrt(in), 1/sqrt(in)).
    bound = 1.0 / (in_features ** 0.5)
    weight = jax.random.uniform(
        kw, (out_features, in_features), dtype=jnp.float32, minval=-bound, maxval=bound
    )
    bias = jax.random.uniform(
        kb, (out_features,), dtype=jnp.float32, minval=-bound, maxval=bound
    )

    y = quantized_linear(x, weight, bias, bit_data=bit_data)
    y = jax.block_until_ready(y)

    y_ref = _reference(x, weight, bias, bit_data=bit_data)
    assert y.shape == (batch, out_features)
    assert jnp.allclose(y, y_ref, atol=1e-4, rtol=1e-4), float(
        jnp.max(jnp.abs(y - y_ref))
    )

    print("KERNEL_OK")
</pallas_src>

<mosaic_0001>
module attributes {stable_mosaic.version = 11 : i64} {
  func.func @_qlinear_kernel(%arg0: i32, %arg1: i32, %arg2: i32, %arg3: memref<8x128xbf16, #tpu.memory_space<vmem>>, %arg4: memref<128x128xbf16, #tpu.memory_space<vmem>>, %arg5: memref<8x1xf32, #tpu.memory_space<vmem>>, %arg6: memref<1x128xf32, #tpu.memory_space<vmem>>, %arg7: memref<8x128xf32, #tpu.memory_space<vmem>>, %arg8: memref<8x128xf32, #tpu.memory_space<vmem>>) attributes {dimension_semantics = [#tpu.dimension_semantics<parallel>, #tpu.dimension_semantics<parallel>, #tpu.dimension_semantics<arbitrary>], iteration_bounds = array<i64: 1, 1, 1>, scalar_prefetch = 0 : i64, scratch_operands = 1 : i64, tpu.core_type = #tpu.core_type<tc>, window_params = [{transform_indices = @transform_0, window_bounds = array<i64: 8, 128>}, {transform_indices = @transform_1, window_bounds = array<i64: 128, 128>}, {transform_indices = @transform_2, window_bounds = array<i64: 8, 1>}, {transform_indices = @transform_3, window_bounds = array<i64: 1, 128>}, {transform_indices = @transform_4, window_bounds = array<i64: 8, 128>}]} {
    %c0_i32 = arith.constant 0 : i32
    %0 = arith.cmpi eq, %arg2, %c0_i32 : i32
    %1 = arith.extui %0 : i1 to i32
    %c0_i32_0 = arith.constant 0 : i32
    %2 = arith.cmpi ne, %1, %c0_i32_0 : i32
    scf.if %2 {
      %cst_10 = arith.constant 0.000000e+00 : f32
      %12 = vector.broadcast %cst_10 : f32 to vector<8x128xf32>
      %c0_11 = arith.constant 0 : index
      %c0_12 = arith.constant 0 : index
      %13 = vector.load %arg8[%c0_11, %c0_12] : memref<8x128xf32, #tpu.memory_space<vmem>>, vector<8x128xf32>
      tpu.vector_store %arg8[%c0_11, %c0_12], %12 {strides = array<i32>} : memref<8x128xf32, #tpu.memory_space<vmem>>, vector<8x128xf32>,
    } else {
    }
    %c0 = arith.constant 0 : index
    %c0_1 = arith.constant 0 : index
    %3 = vector.load %arg8[%c0, %c0_1] : memref<8x128xf32, #tpu.memory_space<vmem>>, vector<8x128xf32>
    %c0_2 = arith.constant 0 : index
    %c0_3 = arith.constant 0 : index
    %4 = vector.load %arg3[%c0_2, %c0_3] : memref<8x128xbf16, #tpu.memory_space<vmem>>, vector<8x128xbf16>
    %c0_4 = arith.constant 0 : index
    %c0_5 = arith.constant 0 : index
    %5 = vector.load %arg4[%c0_4, %c0_5] : memref<128x128xbf16, #tpu.memory_space<vmem>>, vector<128x128xbf16>
    %cst = arith.constant dense<0.000000e+00> : vector<8x128xf32>
    %6 = tpu.matmul %4, %5, %cst {dimension_numbers = #tpu.dot_dimension_numbers<[1], [0], [0], [1], [0, 0, 1, 1], [], []>} : vector<8x128xbf16>, vector<128x128xbf16>, vector<8x128xf32> -> vector<8x128xf32>
    %7 = arith.addf %3, %6 : vector<8x128xf32>
    %c0_6 = arith.constant 0 : index
    %c0_7 = arith.constant 0 : index
    %8 = vector.load %arg8[%c0_6, %c0_7] : memref<8x128xf32, #tpu.memory_space<vmem>>, vector<8x128xf32>
    tpu.vector_store %arg8[%c0_6, %c0_7], %7 {strides = array<i32>} : memref<8x128xf32, #tpu.memory_space<vmem>>, vector<8x128xf32>,
    %c0_i32_8 = arith.constant 0 : i32
    %9 = arith.cmpi eq, %arg2, %c0_i32_8 : i32
    %10 = arith.extui %9 : i1 to i32
    %c0_i32_9 = arith.constant 0 : i32
    %11 = arith.cmpi ne, %10, %c0_i32_9 : i32
    scf.if %11 {
      %c0_10 = arith.constant 0 : index
      %c0_11 = arith.constant 0 : index
      %12 = vector.load %arg8[%c0_10, %c0_11] : memref<8x128xf32, #tpu.memory_space<vmem>>, vector<8x128xf32>
      %c0_12 = arith.constant 0 : index
      %c0_13 = arith.constant 0 : index
      %13 = vector.load %arg5[%c0_12, %c0_13] : memref<8x1xf32, #tpu.memory_space<vmem>>, vector<8x1xf32>
      %14 = vector.broadcast %13 : vector<8x1xf32> to vector<8x128xf32>
      %15 = arith.mulf %12, %14 : vector<8x128xf32>
      %c0_14 = arith.constant 0 : index
      %c0_15 = arith.constant 0 : index
      %16 = vector.load %arg6[%c0_14, %c0_15] : memref<1x128xf32, #tpu.memory_space<vmem>>, vector<1x128xf32>
      %17 = vector.broadcast %16 : vector<1x128xf32> to vector<8x128xf32>
      %18 = arith.addf %15, %17 : vector<8x128xf32>
      %c0_16 = arith.constant 0 : index
      %c0_17 = arith.constant 0 : index
      %19 = vector.load %arg7[%c0_16, %c0_17] : memref<8x128xf32, #tpu.memory_space<vmem>>, vector<8x128xf32>
      tpu.vector_store %arg7[%c0_16, %c0_17], %18 {strides = array<i32>} : memref<8x128xf32, #tpu.memory_space<vmem>>, vector<8x128xf32>,
    } else {
    }
    return
  }
  func.func @transform_0(%arg0: i32, %arg1: i32, %arg2: i32) -> (i32, i32) {
    %c0_i32 = arith.constant 0 : i32
    return %arg0, %arg2 : i32, i32
  }
  func.func @transform_1(%arg0: i32, %arg1: i32, %arg2: i32) -> (i32, i32) {
    %c0_i32 = arith.constant 0 : i32
    return %arg2, %arg1 : i32, i32
  }
  func.func @transform_2(%arg0: i32, %arg1: i32, %arg2: i32) -> (i32, i32) {
    %c0_i32 = arith.constant 0 : i32
    %c0_i32_0 = arith.constant 0 : i32
    return %arg0, %c0_i32 : i32, i32
  }
  func.func @transform_3(%arg0: i32, %arg1: i32, %arg2: i32) -> (i32, i32) {
    %c0_i32 = arith.constant 0 : i32
    %c0_i32_0 = arith.constant 0 : i32
    return %c0_i32, %arg1 : i32, i32
  }
  func.func @transform_4(%arg0: i32, %arg1: i32, %arg2: i32) -> (i32, i32) {
    %c0_i32 = arith.constant 0 : i32
    return %arg0, %arg1 : i32, i32
  }
}

</mosaic_0001>

<llo_original>
// kernel: tpu_custom_call.1
$region0: #{tpu_custom_call.1}
  #allocation0 [shape = 'u32[]', space=smem, size = 0x4, offset = 0x4, fixed_abs, tag = 'smem constant byte address 0x4 - core index']
  #allocation1 [shape = 'u32[144,128]{1,0:T(1,128)}', space=vmem, size = 0x12000, scoped, tag = 'internal scratch']
  #allocation2 [shape = 'f32[8,128]{1,0:T(8,128)}', space=vmem, size = 0x1000, scoped, tag = 'scratch operand']
  %s0 = inlined_call_operand.vmem [shape: bf16[8,128], index: 0, kind: input, shape index: {}]
  %s1 = inlined_call_operand.hbm [shape: bf16[128,128], index: 1, kind: input, shape index: {}]
  %s2 = inlined_call_operand.vmem [shape: f32[8,1], index: 2, kind: input, shape index: {}]
  %s3 = inlined_call_operand.vmem [shape: f32[1,128], index: 3, kind: input, shape index: {}]
  %s4 = inlined_call_operand.hbm [shape: f32[8,128], index: 4, kind: output, shape index: {}]
  %s5 = sld [smem:[#allocation0]]
  $region38: #{tpu_custom_call.1} parent=0
    _
  %s7 = ssub.s32 1, %s5
  %s8 = scalar_select 0, %s7, %s5
  $region1: #{tpu_custom_call.1} parent=0
    #allocation3 [shape = 'u8[32768]{0}', space=vmem, size = 0x8000, scoped, tag = 'input window, operand 1, single buffered']
    #allocation4 [shape = 's32[1]{0}', space=sflag, size = 0x4, scoped, tag = 'scoped memory for tpu_custom_call.1']
    #allocation5 [shape = 's32[1]{0}', space=sflag, size = 0x4, scoped, tag = 'scoped memory for tpu_custom_call.1']
    #allocation6 [shape = 'u8[4096]{0}', space=vmem, size = 0x1000, scoped, tag = 'output window, operand 0, single buffered']
    %9 = vsyncpa [#allocation4], 0
    %10 = vsyncpa [#allocation5], 0
    // Predicated region
    $region2: #{tpu_custom_call.1} parent=1 // pred_check
      _
    $region3: #{tpu_custom_call.1} parent=1 // pred_check_branch
      %12 = sbr.rel (0) target = $region5
    $region4: #{tpu_custom_call.1} parent=1 // pred_region
      _
    $region5: #{tpu_custom_call.1} parent=1 // pred_fallthru
      _
    // Predicated region
    $region6: #{tpu_custom_call.1} parent=1 // pred_check
      _
    $region7: #{tpu_custom_call.1} parent=1 // pred_check_branch
      %14 = sbr.rel (0) target = $region9
    $region8: #{tpu_custom_call.1} parent=1 // pred_region
      %s16 = ssub.s32 1024, 1024
      %17 = vsyncadd [#allocation4], %s16
      %s18 = sshll.u32 [#allocation3], 4
      %s19 = int_to_ptr.vmem [resolvable:$true] %s18
      %24 = dma.hbm_to_vmem [thread:$0]  %s1, 1024, %s19, [#allocation4], 64, 64, 4
    $region9: #{tpu_custom_call.1} parent=1 // pred_fallthru
      _
    // Predicated region
    $region10: #{tpu_custom_call.1} parent=1 // pred_check
      _
    $region11: #{tpu_custom_call.1} parent=1 // pred_check_branch
      %26 = sbr.rel (0) target = $region13
    $region12: #{tpu_custom_call.1} parent=1 // pred_region
      _
    $region13: #{tpu_custom_call.1} parent=1 // pred_fallthru
      _
    // Predicated region
    $region14: #{tpu_custom_call.1} parent=1 // pred_check
      _
    $region15: #{tpu_custom_call.1} parent=1 // pred_check_branch
      %28 = sbr.rel (0) target = $region17
    $region16: #{tpu_custom_call.1} parent=1 // pred_region
      _
    $region17: #{tpu_custom_call.1} parent=1 // pred_fallthru
      _
    // Predicated region
    $region18: #{tpu_custom_call.1} parent=1 // pred_check
      _
    $region19: #{tpu_custom_call.1} parent=1 // pred_check_branch
      %30 = sbr.rel (0) target = $region21
    $region20: #{tpu_custom_call.1} parent=1 // pred_region
      %31 = dma.done [#allocation4], 1024
    $region21: #{tpu_custom_call.1} parent=1 // pred_fallthru
      _
    %p33 = scmp.eq.s32.totalorder 0, 0
    // Predicated region
    $region22: #{tpu_custom_call.1} parent=1 // pred_check
      %p34 = pneg %p33
    $region23: #{tpu_custom_call.1} parent=1 // pred_check_branch
      %36 = sbr.rel (%p34) target = $region25
    $region24: #{tpu_custom_call.1} parent=1 // pred_region
      %37 = vst [vmem:[#allocation2] sm:$0xff] 0.0
    $region25: #{tpu_custom_call.1} parent=1 // pred_fallthru
      _
    %v38 = vld [vmem:[#allocation2] sm:$0xff]
    %v39 = vld [vmem:[%s0] sm:$0xf]
    %v40 = vld [vmem:[#allocation3] sm:$0xf]
    %v41 = vld [vmem:[#allocation3 + $0x4] sm:$0xf]
    %v42 = vld [vmem:[#allocation3 + $0x8] sm:$0xf]
    %v43 = vld [vmem:[#allocation3 + $0xc] sm:$0xf]
    %v44 = vld [vmem:[#allocation3 + $0x10] sm:$0xf]
    %v45 = vld [vmem:[#allocation3 + $0x14] sm:$0xf]
    %v46 = vld [vmem:[#allocation3 + $0x18] sm:$0xf]
    %v47 = vld [vmem:[#allocation3 + $0x1c] sm:$0xf]
    %v48 = vld [vmem:[#allocation3 + $0x20] sm:$0xf]
    %v49 = vld [vmem:[#allocation3 + $0x24] sm:$0xf]
    %v50 = vld [vmem:[#allocation3 + $0x28] sm:$0xf]
    %v51 = vld [vmem:[#allocation3 + $0x2c] sm:$0xf]
    %v52 = vld [vmem:[#allocation3 + $0x30] sm:$0xf]
    %v53 = vld [vmem:[#allocation3 + $0x34] sm:$0xf]
    %v54 = vld [vmem:[#allocation3 + $0x38] sm:$0xf]
    %v55 = vld [vmem:[#allocation3 + $0x3c] sm:$0xf]
    %v72 = vunpack.c.l.b16 %v40
    %v73 = vunpack.c.l.b16 %v41
    %v74 = vunpack.c.l.b16 %v42
    %v75 = vunpack.c.l.b16 %v43
    %v76 = vunpack.c.l.b16 %v44
    %v77 = vunpack.c.l.b16 %v45
    %v78 = vunpack.c.l.b16 %v46
    %v79 = vunpack.c.l.b16 %v47
    %v80 = vunpack.c.l.b16 %v48
    %v81 = vunpack.c.l.b16 %v49
    %v82 = vunpack.c.l.b16 %v50
    %v83 = vunpack.c.l.b16 %v51
    %v84 = vunpack.c.l.b16 %v52
    %v85 = vunpack.c.l.b16 %v53
    %v86 = vunpack.c.l.b16 %v54
    %v87 = vunpack.c.l.b16 %v55
    %v88 = vpack.c.b16 %v73, %v72
    %v89 = vpack.c.b16 %v75, %v74
    %v90 = vpack.c.b16 %v77, %v76
    %v91 = vpack.c.b16 %v79, %v78
    %v92 = vpack.c.b16 %v81, %v80
    %v93 = vpack.c.b16 %v83, %v82
    %v94 = vpack.c.b16 %v85, %v84
    %v95 = vpack.c.b16 %v87, %v86
    %104 = vmatprep.subr.bf16.mxu0 0
    %105 = vmatpush1.bf16.msra.mxu0 %v88
    %106 = vmatprep.subr.bf16.mxu0 0
    %107 = vmatpush1.bf16.msra.mxu0 %v89
    %108 = vmatprep.subr.bf16.mxu0 0
    %109 = vmatpush1.bf16.msra.mxu0 %v90
    %110 = vmatprep.subr.bf16.mxu0 0
    %111 = vmatpush1.bf16.msra.mxu0 %v91
    %112 = vmatprep.subr.bf16.mxu0 0
    %113 = vmatpush1.bf16.msra.mxu0 %v92
    %114 = vmatprep.subr.bf16.mxu0 0
    %115 = vmatpush1.bf16.msra.mxu0 %v93
    %116 = vmatprep.subr.bf16.mxu0 0
    %117 = vmatpush1.bf16.msra.mxu0 %v94
    %118 = vmatprep.subr.bf16.mxu0 0
    %119 = vmatpush1.bf16.msra.mxu0 %v95
    %120 = vmatprep.subr.bf16.mxu0 0
    %121 = vmatpush1.bf16.msra.mxu0 0
    %122 = vmatprep.subr.bf16.mxu0 0
    %123 = vmatpush1.bf16.msra.mxu0 0
    %124 = vmatprep.subr.bf16.mxu0 0
    %125 = vmatpush1.bf16.msra.mxu0 0
    %126 = vmatprep.subr.bf16.mxu0 0
    %127 = vmatpush1.bf16.msra.mxu0 0
    %128 = vmatprep.subr.bf16.mxu0 0
    %129 = vmatpush1.bf16.msra.mxu0 0
    %130 = vmatprep.subr.bf16.mxu0 0
    %131 = vmatpush1.bf16.msra.mxu0 0
    %132 = vmatprep.subr.bf16.mxu0 0
    %133 = vmatpush1.bf16.msra.mxu0 0
    %134 = vmatprep.subr.bf16.mxu0 0
    %135 = vmatpush1.bf16.msra.mxu0 0
    %136 = vmatprep.mubr.bf16.mxu0 0
    %137 = vmatmul.mubr.bf16.gmra.mrb[0].mxu0 %v39
    %v138 = vpop.f32.mrb[0].mxu0
    %v139 = vadd.f32 0.0, %v138
    %v140 = vpop.f32.mrb[0].mxu0
    %v141 = vpop.f32.mrb[0].mxu0
    %v142 = vpop.f32.mrb[0].mxu0
    %143 = vdwg.mxu0
    %v144 = vadd.f32 %v38, %v139
    %145 = vst [vmem:[#allocation2] sm:$0xff] %v144
    // Predicated region
    $region26: #{tpu_custom_call.1} parent=1 // pred_check
      %p146 = pneg %p33
    $region27: #{tpu_custom_call.1} parent=1 // pred_check_branch
      %148 = sbr.rel (%p146) target = $region29
    $region28: #{tpu_custom_call.1} parent=1 // pred_region
      %v149 = vld [vmem:[#allocation2] sm:$0xff]
      %v150 = vld [vmem:[%s2] sm:$0xff]
      %152 = vset.pattern.permute.xlu0 0
      %153 = vperm.xlu0 %152, %v150
      %v154 = vpop.permute.xlu0 %153
      %v156 = vmul.f32 %v149, %v154
      %v157 = vld [vmem:[%s3] sm:$0x1]
      %v159 = vlaneseq
      %v160 = vshrl.u32 %v159, 7
      %v161 = vsub.s32 0, %v160
      %v162 = vrot.slane %v157, %v161
      %v164 = vadd.f32 %v156, %v162
      %165 = vst [vmem:[#allocation6] sm:$0xff] %v164
    $region29: #{tpu_custom_call.1} parent=1 // pred_fallthru
      _
    // Predicated region
    $region30: #{tpu_custom_call.1} parent=1 // pred_check
      _
    $region31: #{tpu_custom_call.1} parent=1 // pred_check_branch
      %167 = sbr.rel (0) target = $region33
    $region32: #{tpu_custom_call.1} parent=1 // pred_region
      %s169 = ssub.s32 128, 128
      %170 = vsyncadd [#allocation5], %s169
      %s172 = sshll.u32 [#allocation6], 4
      %s173 = int_to_ptr.vmem [resolvable:$true] %s172
      %175 = dma.vmem_to_hbm [thread:$0]  %s173, 128, %s4, [#allocation5]
    $region33: #{tpu_custom_call.1} parent=1 // pred_fallthru
      _
    // Predicated region
    $region34: #{tpu_custom_call.1} parent=1 // pred_check
      _
    $region35: #{tpu_custom_call.1} parent=1 // pred_check_branch
      %177 = sbr.rel (0) target = $region37
    $region36: #{tpu_custom_call.1} parent=1 // pred_region
      %178 = dma.done [#allocation5], 128
    $region37: #{tpu_custom_call.1} parent=1 // pred_fallthru
      _
    %179 = vsyncpa [#allocation4], 1
    %180 = vsyncpa [#allocation5], 1

</llo_original>
